<compile_context>
chip_gen: v5e
topology: v5e:2x2
jax: 0.10.0
libtpu: 0.0.40
codegen_flags: <defaults>
</compile_context>

<pallas_src>
import jax
import jax.numpy as jnp
from jax import lax
from jax.experimental import pallas as pl
from jax.experimental.pallas import tpu as pltpu  # noqa: F401  (TPU backend)

# ---------------------------------------------------------------- config ----
BINS = 8
BIN_LIST = [float(i + 1) for i in range(BINS)]        # args.bin_list
BIN_MIN = min(BIN_LIST)
BIN_MAX = max(BIN_LIST)
TEMPERATURE = 0.1                                     # args.temperature
LOGIT_SCALE = 100.0 / TEMPERATURE                     # fold 100*(.)/temperature

B = 2        # batch
T = 32       # image tokens -> reshaped to 4 x 8 spatial grid
D = 32       # embedding dim
H, W = 4, 8  # spatial grid implied by .reshape(-1, bins, 4, 8)
N = B * T    # whole-batch token count

MLP_DIMS = [BINS, 64, 128, 256, 128, 64, BINS]        # flag == 1 architecture


# ----------------------------------------------------------- fused kernel ----
def _depth_blip_kernel(img_ref, text_ref, bin_ref,
                       w1, b1, w2, b2, w3, b3, w4, b4, w5, b5, w6, b6,
                       depth_ref):
    """One launch: auto_bins MLP + L2-normalize + scaled matmul + softmax over
    bins + bin-weighted sum, over the whole (B*T, D) batch."""

    # ---- auto_bins MLP on the (1, BINS) bin tensor (image independent) ----
    def lin(x, w, b):
        return jnp.dot(x, w[...], preferred_element_type=jnp.float32) + b[...]

    h = bin_ref[...]                                    # (1, BINS)
    h = jnp.maximum(lin(h, w1, b1), 0.0)                # Linear(bins,64) + ReLU
    h = jnp.maximum(lin(h, w2, b2), 0.0)                # Linear(64,128)  + ReLU
    h = jnp.maximum(lin(h, w3, b3), 0.0)                # Linear(128,256) + ReLU (+Dropout=id)
    h = jnp.maximum(lin(h, w4, b4), 0.0)                # Linear(256,128) + ReLU (+Dropout=id)
    h = jnp.maximum(lin(h, w5, b5), 0.0)                # Linear(128,64)  + ReLU (+Dropout=id)
    s = jax.nn.sigmoid(lin(h, w6, b6))                  # Linear(64,bins) + Sigmoid
    bin_vals = BIN_MIN + s * s * (BIN_MAX - BIN_MIN)    # (1, BINS)

    # ---- depth head: whole batch at once ----
    x = img_ref[...]                                    # (N, D)
    # img_f / img_f.norm(dim=-1, keepdim=True)  (no eps; matches torch semantics)
    xn = x * lax.rsqrt(jnp.sum(x * x, axis=-1, keepdims=True))

    # Fold (100 / temperature) into the small (BINS, D) text operand, then
    # contract over D on the MXU: (N, D) x (BINS, D)^T -> (N, BINS).
    t_scaled = text_ref[...] * LOGIT_SCALE
    logits = lax.dot_general(
        xn, t_scaled,
        dimension_numbers=(((1,), (1,)), ((), ())),
        preferred_element_type=jnp.float32)             # (N, BINS)

    # softmax over the bins axis (== dim=1 of the permuted/reshaped logits)
    m = jnp.max(logits, axis=-1, keepdims=True)
    e = jnp.exp(logits - m)
    inv_den = pl.reciprocal(jnp.sum(e, axis=-1, keepdims=True), approx=True)
    p = e * inv_den                                     # (N, BINS)

    # (softmax * bin_tensor).sum(bins)  -> one lane-dense (1, N) store
    depth = jnp.sum(p * bin_vals, axis=-1)              # (N,)
    depth_ref[...] = depth.reshape(1, N)


# --------------------------------------------------------------- wrapper ----
def depth_blip_forward(img_f, text_f_kd, bin_tensor, mlp_params):
    """Equivalent of DepthBLIP.forward with method='first', auto_bins=True.
    img_f plays the role of blip2_model.extract_features(...);
    text_f_kd is the zero-shot classifier stored lane-dense as (BINS, D)."""
    flat = []
    for w, b in mlp_params:
        flat.extend([w, b])
    depth_flat = pl.pallas_call(
        _depth_blip_kernel,
        out_shape=jax.ShapeDtypeStruct((1, N), jnp.float32),
    )(img_f.reshape(N, D), text_f_kd, bin_tensor, *flat)
    # token order (b, t) with t = h*W + w  ==  permute(0,2,1).reshape(-1,bins,4,8)
    # followed by softmax/weighted-sum over bins -> (B, 1, 4, 8)
    return depth_flat.reshape(B, 1, H, W)


# ------------------------------------------------------------- reference ----
def reference(img_f, text_f_kd, bin_tensor, params):
    x = bin_tensor
    for (w, b) in params[:-1]:
        x = jnp.maximum(x @ w + b, 0.0)
    w, b = params[-1]
    s = jax.nn.sigmoid(x @ w + b)
    bins = BIN_MIN + s * s * (BIN_MAX - BIN_MIN)                   # (1, BINS)

    imgn = img_f / jnp.linalg.norm(img_f, axis=-1, keepdims=True)
    logits = 100.0 * jnp.einsum("btd,kd->btk", imgn, text_f_kd)    # (B, T, BINS)
    logits = jnp.transpose(logits, (0, 2, 1)).reshape(B, BINS, H, W)
    logits = logits / TEMPERATURE
    p = jax.nn.softmax(logits, axis=1)
    out = p * bins.reshape(1, BINS, 1, 1)
    return out.sum(1, keepdims=True)                               # (B, 1, H, W)


# ------------------------------------------------------------------ main ----
if __name__ == "__main__":
    key = jax.random.PRNGKey(0)
    keys = jax.random.split(key, 2 + 2 * (len(MLP_DIMS) - 1))

    # Deterministic MLP params (PyTorch nn.Linear default: U(-1/sqrt(fan_in), ..))
    mlp_params = []
    ki = 0
    for din, dout in zip(MLP_DIMS[:-1], MLP_DIMS[1:]):
        bound = 1.0 / jnp.sqrt(jnp.float32(din))
        w = jax.random.uniform(keys[ki], (din, dout), jnp.float32, -bound, bound)
        b = jax.random.uniform(keys[ki + 1], (1, dout), jnp.float32, -bound, bound)
        mlp_params.append((w, b))
        ki += 2

    # Synthetic stand-ins for the external encoders (see TODO(synk) above).
    img_f = jax.random.normal(keys[-2], (B, T, D), jnp.float32)     # BLIP2 image feats
    text_f = jax.random.normal(keys[-1], (BINS, D), jnp.float32)    # CLIP text feats
    text_f = text_f / jnp.linalg.norm(text_f, axis=-1, keepdims=True)  # unit-norm rows

    bin_tensor = jnp.asarray(BIN_LIST, jnp.float32).reshape(1, BINS)

    out = depth_blip_forward(img_f, text_f, bin_tensor, mlp_params)
    out = jax.block_until_ready(out)

    ref = reference(img_f, text_f, bin_tensor, mlp_params)
    assert out.shape == (B, 1, H, W), out.shape
    # Tolerance accounts for pl.reciprocal(approx=True) in the softmax
    # normalization (EUP fast path); depth values live in [bin_min, bin_max].
    err = float(jnp.max(jnp.abs(out - ref)))
    assert jnp.allclose(out, ref, rtol=1e-2, atol=1e-2), err

    print("KERNEL_OK")
</pallas_src>

<mosaic_0001>
module attributes {stable_mosaic.version = 11 : i64} {
  func.func @_depth_blip_kernel(%arg0: memref<64x32xf32, #tpu.memory_space<vmem>>, %arg1: memref<8x32xf32, #tpu.memory_space<vmem>>, %arg2: memref<1x8xf32, #tpu.memory_space<vmem>>, %arg3: memref<8x64xf32, #tpu.memory_space<vmem>>, %arg4: memref<1x64xf32, #tpu.memory_space<vmem>>, %arg5: memref<64x128xf32, #tpu.memory_space<vmem>>, %arg6: memref<1x128xf32, #tpu.memory_space<vmem>>, %arg7: memref<128x256xf32, #tpu.memory_space<vmem>>, %arg8: memref<1x256xf32, #tpu.memory_space<vmem>>, %arg9: memref<256x128xf32, #tpu.memory_space<vmem>>, %arg10: memref<1x128xf32, #tpu.memory_space<vmem>>, %arg11: memref<128x64xf32, #tpu.memory_space<vmem>>, %arg12: memref<1x64xf32, #tpu.memory_space<vmem>>, %arg13: memref<64x8xf32, #tpu.memory_space<vmem>>, %arg14: memref<1x8xf32, #tpu.memory_space<vmem>>, %arg15: memref<1x64xf32, #tpu.memory_space<vmem>>) attributes {dimension_semantics = [], scalar_prefetch = 0 : i64, scratch_operands = 0 : i64, tpu.core_type = #tpu.core_type<tc>} {
    %c0 = arith.constant 0 : index
    %c0_0 = arith.constant 0 : index
    %0 = vector.load %arg2[%c0, %c0_0] : memref<1x8xf32, #tpu.memory_space<vmem>>, vector<1x8xf32>
    %c0_1 = arith.constant 0 : index
    %c0_2 = arith.constant 0 : index
    %1 = vector.load %arg3[%c0_1, %c0_2] : memref<8x64xf32, #tpu.memory_space<vmem>>, vector<8x64xf32>
    %cst = arith.constant dense<0.000000e+00> : vector<1x64xf32>
    %2 = tpu.matmul %0, %1, %cst {dimension_numbers = #tpu.dot_dimension_numbers<[1], [0], [0], [1], [0, 0, 1, 1], [], []>} : vector<1x8xf32>, vector<8x64xf32>, vector<1x64xf32> -> vector<1x64xf32>
    %c0_3 = arith.constant 0 : index
    %c0_4 = arith.constant 0 : index
    %3 = vector.load %arg4[%c0_3, %c0_4] : memref<1x64xf32, #tpu.memory_space<vmem>>, vector<1x64xf32>
    %4 = arith.addf %2, %3 : vector<1x64xf32>
    %cst_5 = arith.constant 0.000000e+00 : f32
    %5 = vector.broadcast %cst_5 : f32 to vector<1x64xf32>
    %6 = arith.maximumf %4, %5 : vector<1x64xf32>
    %c0_6 = arith.constant 0 : index
    %c0_7 = arith.constant 0 : index
    %7 = vector.load %arg5[%c0_6, %c0_7] : memref<64x128xf32, #tpu.memory_space<vmem>>, vector<64x128xf32>
    %cst_8 = arith.constant dense<0.000000e+00> : vector<1x128xf32>
    %8 = tpu.matmul %6, %7, %cst_8 {dimension_numbers = #tpu.dot_dimension_numbers<[1], [0], [0], [1], [0, 0, 1, 1], [], []>} : vector<1x64xf32>, vector<64x128xf32>, vector<1x128xf32> -> vector<1x128xf32>
    %c0_9 = arith.constant 0 : index
    %c0_10 = arith.constant 0 : index
    %9 = vector.load %arg6[%c0_9, %c0_10] : memref<1x128xf32, #tpu.memory_space<vmem>>, vector<1x128xf32>
    %10 = arith.addf %8, %9 : vector<1x128xf32>
    %cst_11 = arith.constant 0.000000e+00 : f32
    %11 = vector.broadcast %cst_11 : f32 to vector<1x128xf32>
    %12 = arith.maximumf %10, %11 : vector<1x128xf32>
    %c0_12 = arith.constant 0 : index
    %c0_13 = arith.constant 0 : index
    %13 = vector.load %arg7[%c0_12, %c0_13] : memref<128x256xf32, #tpu.memory_space<vmem>>, vector<128x256xf32>
    %cst_14 = arith.constant dense<0.000000e+00> : vector<1x256xf32>
    %14 = tpu.matmul %12, %13, %cst_14 {dimension_numbers = #tpu.dot_dimension_numbers<[1], [0], [0], [1], [0, 0, 1, 1], [], []>} : vector<1x128xf32>, vector<128x256xf32>, vector<1x256xf32> -> vector<1x256xf32>
    %c0_15 = arith.constant 0 : index
    %c0_16 = arith.constant 0 : index
    %15 = vector.load %arg8[%c0_15, %c0_16] : memref<1x256xf32, #tpu.memory_space<vmem>>, vector<1x256xf32>
    %16 = arith.addf %14, %15 : vector<1x256xf32>
    %cst_17 = arith.constant 0.000000e+00 : f32
    %17 = vector.broadcast %cst_17 : f32 to vector<1x256xf32>
    %18 = arith.maximumf %16, %17 : vector<1x256xf32>
    %c0_18 = arith.constant 0 : index
    %c0_19 = arith.constant 0 : index
    %19 = vector.load %arg9[%c0_18, %c0_19] : memref<256x128xf32, #tpu.memory_space<vmem>>, vector<256x128xf32>
    %cst_20 = arith.constant dense<0.000000e+00> : vector<1x128xf32>
    %20 = tpu.matmul %18, %19, %cst_20 {dimension_numbers = #tpu.dot_dimension_numbers<[1], [0], [0], [1], [0, 0, 1, 1], [], []>} : vector<1x256xf32>, vector<256x128xf32>, vector<1x128xf32> -> vector<1x128xf32>
    %c0_21 = arith.constant 0 : index
    %c0_22 = arith.constant 0 : index
    %21 = vector.load %arg10[%c0_21, %c0_22] : memref<1x128xf32, #tpu.memory_space<vmem>>, vector<1x128xf32>
    %22 = arith.addf %20, %21 : vector<1x128xf32>
    %cst_23 = arith.constant 0.000000e+00 : f32
    %23 = vector.broadcast %cst_23 : f32 to vector<1x128xf32>
    %24 = arith.maximumf %22, %23 : vector<1x128xf32>
    %c0_24 = arith.constant 0 : index
    %c0_25 = arith.constant 0 : index
    %25 = vector.load %arg11[%c0_24, %c0_25] : memref<128x64xf32, #tpu.memory_space<vmem>>, vector<128x64xf32>
    %cst_26 = arith.constant dense<0.000000e+00> : vector<1x64xf32>
    %26 = tpu.matmul %24, %25, %cst_26 {dimension_numbers = #tpu.dot_dimension_numbers<[1], [0], [0], [1], [0, 0, 1, 1], [], []>} : vector<1x128xf32>, vector<128x64xf32>, vector<1x64xf32> -> vector<1x64xf32>
    %c0_27 = arith.constant 0 : index
    %c0_28 = arith.constant 0 : index
    %27 = vector.load %arg12[%c0_27, %c0_28] : memref<1x64xf32, #tpu.memory_space<vmem>>, vector<1x64xf32>
    %28 = arith.addf %26, %27 : vector<1x64xf32>
    %cst_29 = arith.constant 0.000000e+00 : f32
    %29 = vector.broadcast %cst_29 : f32 to vector<1x64xf32>
    %30 = arith.maximumf %28, %29 : vector<1x64xf32>
    %c0_30 = arith.constant 0 : index
    %c0_31 = arith.constant 0 : index
    %31 = vector.load %arg13[%c0_30, %c0_31] : memref<64x8xf32, #tpu.memory_space<vmem>>, vector<64x8xf32>
    %cst_32 = arith.constant dense<0.000000e+00> : vector<1x8xf32>
    %32 = tpu.matmul %30, %31, %cst_32 {dimension_numbers = #tpu.dot_dimension_numbers<[1], [0], [0], [1], [0, 0, 1, 1], [], []>} : vector<1x64xf32>, vector<64x8xf32>, vector<1x8xf32> -> vector<1x8xf32>
    %c0_33 = arith.constant 0 : index
    %c0_34 = arith.constant 0 : index
    %33 = vector.load %arg14[%c0_33, %c0_34] : memref<1x8xf32, #tpu.memory_space<vmem>>, vector<1x8xf32>
    %34 = arith.addf %32, %33 : vector<1x8xf32>
    %35 = arith.negf %34 : vector<1x8xf32>
    %36 = math.exp %35 : vector<1x8xf32>
    %cst_35 = arith.constant 1.000000e+00 : f32
    %37 = vector.broadcast %cst_35 : f32 to vector<1x8xf32>
    %38 = arith.addf %37, %36 : vector<1x8xf32>
    %39 = arith.divf %37, %38 : vector<1x8xf32>
    %40 = arith.mulf %39, %39 : vector<1x8xf32>
    %cst_36 = arith.constant 7.000000e+00 : f32
    %41 = vector.broadcast %cst_36 : f32 to vector<1x8xf32>
    %42 = arith.mulf %40, %41 : vector<1x8xf32>
    %cst_37 = arith.constant 1.000000e+00 : f32
    %43 = vector.broadcast %cst_37 : f32 to vector<1x8xf32>
    %44 = arith.addf %43, %42 : vector<1x8xf32>
    %c0_38 = arith.constant 0 : index
    %c0_39 = arith.constant 0 : index
    %45 = vector.load %arg0[%c0_38, %c0_39] : memref<64x32xf32, #tpu.memory_space<vmem>>, vector<64x32xf32>
    %46 = arith.mulf %45, %45 : vector<64x32xf32>
    %cst_40 = arith.constant dense<0.000000e+00> : vector<64xf32>
    %47 = vector.multi_reduction <add>, %46, %cst_40 [1] : vector<64x32xf32> to vector<64xf32>
    %48 = vector.shape_cast %47 : vector<64xf32> to vector<64x1xf32>
    %49 = math.rsqrt %48 : vector<64x1xf32>
    %50 = vector.broadcast %49 : vector<64x1xf32> to vector<64x32xf32>
    %51 = arith.mulf %45, %50 : vector<64x32xf32>
    %c0_41 = arith.constant 0 : index
    %c0_42 = arith.constant 0 : index
    %52 = vector.load %arg1[%c0_41, %c0_42] : memref<8x32xf32, #tpu.memory_space<vmem>>, vector<8x32xf32>
    %cst_43 = arith.constant 1.000000e+03 : f32
    %53 = vector.broadcast %cst_43 : f32 to vector<8x32xf32>
    %54 = arith.mulf %52, %53 : vector<8x32xf32>
    %cst_44 = arith.constant dense<0.000000e+00> : vector<64x8xf32>
    %55 = tpu.matmul %51, %54, %cst_44 {dimension_numbers = #tpu.dot_dimension_numbers<[1], [1], [0], [0], [0, 0, 1, 0], [], []>} : vector<64x32xf32>, vector<8x32xf32>, vector<64x8xf32> -> vector<64x8xf32>
    %cst_45 = arith.constant dense<0xFF800000> : vector<64xf32>
    %56 = vector.multi_reduction <maximumf>, %55, %cst_45 [1] : vector<64x8xf32> to vector<64xf32>
    %57 = vector.shape_cast %56 : vector<64xf32> to vector<64x1xf32>
    %58 = vector.broadcast %57 : vector<64x1xf32> to vector<64x8xf32>
    %59 = arith.subf %55, %58 : vector<64x8xf32>
    %60 = math.exp %59 : vector<64x8xf32>
    %cst_46 = arith.constant dense<0.000000e+00> : vector<64xf32>
    %61 = vector.multi_reduction <add>, %60, %cst_46 [1] : vector<64x8xf32> to vector<64xf32>
    %62 = vector.shape_cast %61 : vector<64xf32> to vector<64x1xf32>
    %63 = tpu.reciprocal %62 {approx = true} : vector<64x1xf32> -> vector<64x1xf32>
    %64 = vector.broadcast %63 : vector<64x1xf32> to vector<64x8xf32>
    %65 = arith.mulf %60, %64 : vector<64x8xf32>
    %66 = vector.broadcast %44 : vector<1x8xf32> to vector<64x8xf32>
    %67 = arith.mulf %65, %66 : vector<64x8xf32>
    %cst_47 = arith.constant dense<0.000000e+00> : vector<64xf32>
    %68 = vector.multi_reduction <add>, %67, %cst_47 [1] : vector<64x8xf32> to vector<64xf32>
    %69 = vector.shape_cast %68 : vector<64xf32> to vector<1x64xf32>
    %c0_48 = arith.constant 0 : index
    %c0_49 = arith.constant 0 : index
    %70 = vector.load %arg15[%c0_48, %c0_49] : memref<1x64xf32, #tpu.memory_space<vmem>>, vector<1x64xf32>
    tpu.vector_store %arg15[%c0_48, %c0_49], %69 {strides = array<i32>} : memref<1x64xf32, #tpu.memory_space<vmem>>, vector<1x64xf32>,
    return
  }
}

</mosaic_0001>

<llo_original>
// kernel: tpu_custom_call.1
$region0: #{tpu_custom_call.1}
  #allocation0 [shape = 'u32[]', space=smem, size = 0x4, offset = 0x4, fixed_abs, tag = 'smem constant byte address 0x4 - core index']
  #allocation1 [shape = 'u32[72,128]{1,0:T(1,128)}', space=vmem, size = 0x9000, scoped, tag = 'internal scratch']
  %s0 = inlined_call_operand.vmem [shape: f32[64,32], index: 0, kind: input, shape index: {}]
  %s1 = inlined_call_operand.vmem [shape: f32[8,32], index: 1, kind: input, shape index: {}]
  %s2 = inlined_call_operand.vmem [shape: f32[1,8], index: 2, kind: input, shape index: {}]
  %s3 = inlined_call_operand.vmem [shape: f32[8,64], index: 3, kind: input, shape index: {}]
  %s4 = inlined_call_operand.vmem [shape: f32[1,64], index: 4, kind: input, shape index: {}]
  %s5 = inlined_call_operand.hbm [shape: f32[64,128], index: 5, kind: input, shape index: {}]
  %s6 = inlined_call_operand.vmem [shape: f32[1,128], index: 6, kind: input, shape index: {}]
  %s7 = inlined_call_operand.vmem [shape: f32[128,256], index: 7, kind: input, shape index: {}]
  %s8 = inlined_call_operand.vmem [shape: f32[1,256], index: 8, kind: input, shape index: {}]
  %s9 = inlined_call_operand.hbm [shape: f32[256,128], index: 9, kind: input, shape index: {}]
  %s10 = inlined_call_operand.vmem [shape: f32[1,128], index: 10, kind: input, shape index: {}]
  %s11 = inlined_call_operand.vmem [shape: f32[128,64], index: 11, kind: input, shape index: {}]
  %s12 = inlined_call_operand.vmem [shape: f32[1,64], index: 12, kind: input, shape index: {}]
  %s13 = inlined_call_operand.vmem [shape: f32[64,8], index: 13, kind: input, shape index: {}]
  %s14 = inlined_call_operand.vmem [shape: f32[1,8], index: 14, kind: input, shape index: {}]
  %s15 = inlined_call_operand.hbm [shape: f32[1,64], index: 15, kind: output, shape index: {}]
  %s16 = sld [smem:[#allocation0]]
  $region78: #{tpu_custom_call.1} parent=0
    _
  %s18 = ssub.s32 1, %s16
  %s19 = scalar_select 0, %s18, %s16
  $region1: #{tpu_custom_call.1} parent=0
    #allocation2 [shape = 'u8[32768]{0}', space=vmem, size = 0x8000, scoped, tag = 'input window, operand 5, single buffered']
    #allocation3 [shape = 's32[1]{0}', space=sflag, size = 0x4, scoped, tag = 'scoped memory for tpu_custom_call.1']
    #allocation4 [shape = 's32[1]{0}', space=sflag, size = 0x4, scoped, tag = 'scoped memory for tpu_custom_call.1']
    #allocation5 [shape = 'u8[131072]{0}', space=vmem, size = 0x20000, scoped, tag = 'input window, operand 9, single buffered']
    #allocation6 [shape = 's32[1]{0}', space=sflag, size = 0x4, scoped, tag = 'scoped memory for tpu_custom_call.1']
    #allocation7 [shape = 'u8[512]{0}', space=vmem, size = 0x400, scoped, tag = 'output window, operand 0, single buffered']
    %20 = vsyncpa [#allocation3], 0
    %21 = vsyncpa [#allocation6], 0
    %22 = vsyncpa [#allocation4], 0
    // Predicated region
    $region2: #{tpu_custom_call.1} parent=1 // pred_check
      _
    $region3: #{tpu_custom_call.1} parent=1 // pred_check_branch
      %24 = sbr.rel (0) target = $region5
    $region4: #{tpu_custom_call.1} parent=1 // pred_region
      _
    $region5: #{tpu_custom_call.1} parent=1 // pred_fallthru
      _
    // Predicated region
    $region6: #{tpu_custom_call.1} parent=1 // pred_check
      _
    $region7: #{tpu_custom_call.1} parent=1 // pred_check_branch
      %26 = sbr.rel (0) target = $region9
    $region8: #{tpu_custom_call.1} parent=1 // pred_region
      _
    $region9: #{tpu_custom_call.1} parent=1 // pred_fallthru
      _
    // Predicated region
    $region10: #{tpu_custom_call.1} parent=1 // pred_check
      _
    $region11: #{tpu_custom_call.1} parent=1 // pred_check_branch
      %28 = sbr.rel (0) target = $region13
    $region12: #{tpu_custom_call.1} parent=1 // pred_region
      _
    $region13: #{tpu_custom_call.1} parent=1 // pred_fallthru
      _
    // Predicated region
    $region14: #{tpu_custom_call.1} parent=1 // pred_check
      _
    $region15: #{tpu_custom_call.1} parent=1 // pred_check_branch
      %30 = sbr.rel (0) target = $region17
    $region16: #{tpu_custom_call.1} parent=1 // pred_region
      _
    $region17: #{tpu_custom_call.1} parent=1 // pred_fallthru
      _
    // Predicated region
    $region18: #{tpu_custom_call.1} parent=1 // pred_check
      _
    $region19: #{tpu_custom_call.1} parent=1 // pred_check_branch
      %32 = sbr.rel (0) target = $region21
    $region20: #{tpu_custom_call.1} parent=1 // pred_region
      _
    $region21: #{tpu_custom_call.1} parent=1 // pred_fallthru
      _
    // Predicated region
    $region22: #{tpu_custom_call.1} parent=1 // pred_check
      _
    $region23: #{tpu_custom_call.1} parent=1 // pred_check_branch
      %34 = sbr.rel (0) target = $region25
    $region24: #{tpu_custom_call.1} parent=1 // pred_region
      %36 = vsyncadd [#allocation3], 0
      %s37 = sshll.u32 %s5, 4
      %s38 = int_to_ptr.hbm [resolvable:$true] %s37
      %s39 = sshll.u32 [#allocation2], 4
      %s40 = int_to_ptr.vmem [resolvable:$true] %s39
      %45 = dma.hbm_to_vmem [thread:$0]  %s38, 1024, %s40, [#allocation3], 128, 128, 8
    $region25: #{tpu_custom_call.1} parent=1 // pred_fallthru
      _
    // Predicated region
    $region26: #{tpu_custom_call.1} parent=1 // pred_check
      _
    $region27: #{tpu_custom_call.1} parent=1 // pred_check_branch
      %47 = sbr.rel (0) target = $region29
    $region28: #{tpu_custom_call.1} parent=1 // pred_region
      _
    $region29: #{tpu_custom_call.1} parent=1 // pred_fallthru
      _
    // Predicated region
    $region30: #{tpu_custom_call.1} parent=1 // pred_check
      _
    $region31: #{tpu_custom_call.1} parent=1 // pred_check_branch
      %49 = sbr.rel (0) target = $region33
    $region32: #{tpu_custom_call.1} parent=1 // pred_region
      _
    $region33: #{tpu_custom_call.1} parent=1 // pred_fallthru
      _
    // Predicated region
    $region34: #{tpu_custom_call.1} parent=1 // pred_check
      _
    $region35: #{tpu_custom_call.1} parent=1 // pred_check_branch
      %51 = sbr.rel (0) target = $region37
    $region36: #{tpu_custom_call.1} parent=1 // pred_region
      _
    $region37: #{tpu_custom_call.1} parent=1 // pred_fallthru
      _
    // Predicated region
    $region38: #{tpu_custom_call.1} parent=1 // pred_check
      _
    $region39: #{tpu_custom_call.1} parent=1 // pred_check_branch
      %53 = sbr.rel (0) target = $region41
    $region40: #{tpu_custom_call.1} parent=1 // pred_region
      %55 = vsyncadd [#allocation6], 0
      %s56 = sshll.u32 %s9, 4
      %s57 = int_to_ptr.hbm [resolvable:$true] %s56
      %s58 = sshll.u32 [#allocation5], 4
      %s59 = int_to_ptr.vmem [resolvable:$true] %s58
      %64 = dma.hbm_to_vmem [thread:$0]  %s57, 4096, %s59, [#allocation6], 128, 128, 8
    $region41: #{tpu_custom_call.1} parent=1 // pred_fallthru
      _
    // Predicated region
    $region42: #{tpu_custom_call.1} parent=1 // pred_check
      _
    $region43: #{tpu_custom_call.1} parent=1 // pred_check_branch
      %66 = sbr.rel (0) target = $region45
    $region44: #{tpu_custom_call.1} parent=1 // pred_region
      _
    $region45: #{tpu_custom_call.1} parent=1 // pred_fallthru
      _
    // Predicated region
    $region46: #{tpu_custom_call.1} parent=1 // pred_check
      _
    $region47: #{tpu_custom_call.1} parent=1 // pred_check_branch
      %68 = sbr.rel (0) target = $region49
    $region48: #{tpu_custom_call.1} parent=1 // pred_region
      _
    $region49: #{tpu_custom_call.1} parent=1 // pred_fallthru
      _
    // Predicated region
    $region50: #{tpu_custom_call.1} parent=1 // pred_check
      _
    $region51: #{tpu_custom_call.1} parent=1 // pred_check_branch
      %70 = sbr.rel (0) target = $region53
    $region52: #{tpu_custom_call.1} parent=1 // pred_region
      _
    $region53: #{tpu_custom_call.1} parent=1 // pred_fallthru
      _
    // Predicated region
    $region54: #{tpu_custom_call.1} parent=1 // pred_check
      _
    $region55: #{tpu_custom_call.1} parent=1 // pred_check_branch
      %72 = sbr.rel (0) target = $region57
    $region56: #{tpu_custom_call.1} parent=1 // pred_region
      _
    $region57: #{tpu_custom_call.1} parent=1 // pred_fallthru
      _
    // Predicated region
    $region58: #{tpu_custom_call.1} parent=1 // pred_check
      _
    $region59: #{tpu_custom_call.1} parent=1 // pred_check_branch
      %74 = sbr.rel (0) target = $region61
    $region60: #{tpu_custom_call.1} parent=1 // pred_region
      _
    $region61: #{tpu_custom_call.1} parent=1 // pred_fallthru
      _
    // Predicated region
    $region62: #{tpu_custom_call.1} parent=1 // pred_check
      _
    $region63: #{tpu_custom_call.1} parent=1 // pred_check_branch
      %76 = sbr.rel (0) target = $region65
    $region64: #{tpu_custom_call.1} parent=1 // pred_region
      %78 = dma.done [#allocation3], 1024
    $region65: #{tpu_custom_call.1} parent=1 // pred_fallthru
      _
    // Predicated region
    $region66: #{tpu_custom_call.1} parent=1 // pred_check
      _
    $region67: #{tpu_custom_call.1} parent=1 // pred_check_branch
      %80 = sbr.rel (0) target = $region69
    $region68: #{tpu_custom_call.1} parent=1 // pred_region
      %82 = dma.done [#allocation6], 4096
    $region69: #{tpu_custom_call.1} parent=1 // pred_fallthru
      _
    %v83 = vld [vmem:[%s2] sm:$0x1]
    %v84 = vld [vmem:[%s3] sm:$0xff]
    %v85 = vld [vmem:[%s4] sm:$0x1]
    %vm86 = vcmask 64512
    %v88 = vsel %vm86, %v83, 0
    %90 = vmatpush.msra.mxu0 0.0
    %91 = vmatpush.msra.mxu0 0.0
    %92 = vmatpush.msra.mxu0 0.0
    %93 = vmatpush.msra.mxu0 0.0
    %94 = vmatpush.msra.mxu0 0.0
    %95 = vmatpush.msra.mxu0 0.0
    %96 = vmatpush.msra.mxu0 0.0
    %97 = vmatpush.msra.mxu0 0.0
    %98 = vmatpush.msra.mxu0 0.0
    %99 = vmatpush.msra.mxu0 0.0
    %100 = vmatpush.msra.mxu0 0.0
    %101 = vmatpush.msra.mxu0 0.0
    %102 = vmatpush.msra.mxu0 0.0
    %103 = vmatpush.msra.mxu0 0.0
    %104 = vmatpush.msra.mxu0 0.0
    %105 = vmatpush.msra.mxu0 %v84
    %106 = vmatmul.f32.gmra.mxu0 %v88
    %v107 = vpop.f32.mrf.mxu0
    %v108 = vadd.f32 %v85, %v107
    %109 = vdwg.mxu0
    %v110 = vmax.f32 %v108, 0.0
    %v111 = vld [vmem:[#allocation2] sm:$0xff]
    %v112 = vld [vmem:[#allocation2 + $0x8] sm:$0xff]
    %v113 = vld [vmem:[#allocation2 + $0x10] sm:$0xff]
    %v114 = vld [vmem:[#allocation2 + $0x18] sm:$0xff]
    %v115 = vld [vmem:[#allocation2 + $0x20] sm:$0xff]
    %v116 = vld [vmem:[#allocation2 + $0x28] sm:$0xff]
    %v117 = vld [vmem:[#allocation2 + $0x30] sm:$0xff]
    %v118 = vld [vmem:[#allocation2 + $0x38] sm:$0xff]
    %v119 = vld [vmem:[%s6] sm:$0x1]
    %vm120 = vcmask 523264
    %v122 = vsel %vm120, %v110, 0
    %124 = vmatpush.msra.mxu0 0.0
    %125 = vmatpush.msra.mxu0 0.0
    %126 = vmatpush.msra.mxu0 0.0
    %127 = vmatpush.msra.mxu0 0.0
    %128 = vmatpush.msra.mxu0 0.0
    %129 = vmatpush.msra.mxu0 0.0
    %130 = vmatpush.msra.mxu0 0.0
    %131 = vmatpush.msra.mxu0 0.0
    %132 = vmatpush.msra.mxu0 %v118
    %133 = vmatpush.msra.mxu0 %v117
    %134 = vmatpush.msra.mxu0 %v116
    %135 = vmatpush.msra.mxu0 %v115
    %136 = vmatpush.msra.mxu0 %v114
    %137 = vmatpush.msra.mxu0 %v113
    %138 = vmatpush.msra.mxu0 %v112
    %139 = vmatpush.msra.mxu0 %v111
    %140 = vmatmul.f32.gmra.mxu0 %v122
    %v141 = vpop.f32.mrf.mxu0
    %v142 = vadd.f32 %v119, %v141
    %143 = vdwg.mxu0
    %v144 = vmax.f32 %v142, 0.0
    %v145 = vld [vmem:[%s7] sm:$0xff]
    %v146 = vld [vmem:[%s7 + $0x8] sm:$0xff]
    %v147 = vld [vmem:[%s7 + $0x10] sm:$0xff]
    %v148 = vld [vmem:[%s7 + $0x18] sm:$0xff]
    %v149 = vld [vmem:[%s7 + $0x20] sm:$0xff]
    %v150 = vld [vmem:[%s7 + $0x28] sm:$0xff]
    %v151 = vld [vmem:[%s7 + $0x30] sm:$0xff]
    %v152 = vld [vmem:[%s7 + $0x38] sm:$0xff]
    %v153 = vld [vmem:[%s7 + $0x40] sm:$0xff]
    %v154 = vld [vmem:[%s7 + $0x48] sm:$0xff]
    %v155 = vld [vmem:[%s7 + $0x50] sm:$0xff]
    %v156 = vld [vmem:[%s7 + $0x58] sm:$0xff]
    %v157 = vld [vmem:[%s7 + $0x60] sm:$0xff]
    %v158 = vld [vmem:[%s7 + $0x68] sm:$0xff]
    %v159 = vld [vmem:[%s7 + $0x70] sm:$0xff]
    %v160 = vld [vmem:[%s7 + $0x78] sm:$0xff]
    %v161 = vld [vmem:[%s7 + $0x80] sm:$0xff]
    %v162 = vld [vmem:[%s7 + $0x88] sm:$0xff]
    %v163 = vld [vmem:[%s7 + $0x90] sm:$0xff]
    %v164 = vld [vmem:[%s7 + $0x98] sm:$0xff]
    %v165 = vld [vmem:[%s7 + $0xa0] sm:$0xff]
    %v166 = vld [vmem:[%s7 + $0xa8] sm:$0xff]
    %v167 = vld [vmem:[%s7 + $0xb0] sm:$0xff]
    %v168 = vld [vmem:[%s7 + $0xb8] sm:$0xff]
    %v169 = vld [vmem:[%s7 + $0xc0] sm:$0xff]
    %v170 = vld [vmem:[%s7 + $0xc8] sm:$0xff]
    %v171 = vld [vmem:[%s7 + $0xd0] sm:$0xff]
    %v172 = vld [vmem:[%s7 + $0xd8] sm:$0xff]
    %v173 = vld [vmem:[%s7 + $0xe0] sm:$0xff]
    %v174 = vld [vmem:[%s7 + $0xe8] sm:$0xff]
    %v175 = vld [vmem:[%s7 + $0xf0] sm:$0xff]
    %v176 = vld [vmem:[%s7 + $0xf8] sm:$0xff]
    %v177 = vld [vmem:[%s8] sm:$0x3]
    %v179 = vperm.slane %v177, 0
    %v180 = vperm.slane %v177, 1
    %183 = vmatpush.msra.mxu0 %v175
    %184 = vmatpush.msra.mxu0 %v173
    %185 = vmatpush.msra.mxu0 %v171
    %186 = vmatpush.msra.mxu0 %v169
    %187 = vmatpush.msra.mxu0 %v167
    %188 = vmatpush.msra.mxu0 %v165
    %189 = vmatpush.msra.mxu0 %v163
    %190 = vmatpush.msra.mxu0 %v161
    %191 = vmatpush.msra.mxu0 %v159
    %192 = vmatpush.msra.mxu0 %v157
    %193 = vmatpush.msra.mxu0 %v155
    %194 = vmatpush.msra.mxu0 %v153
    %195 = vmatpush.msra.mxu0 %v151
    %196 = vmatpush.msra.mxu0 %v149
    %197 = vmatpush.msra.mxu0 %v147
    %198 = vmatpush.msra.mxu0 %v145
    %199 = vmatmul.f32.gmra.mxu0 %v144
    %v200 = vpop.f32.mrf.mxu0
    %v201 = vadd.f32 %v179, %v200
    %202 = vdwg.mxu0
    %203 = vmatpush.msra.mxu0 %v176
    %204 = vmatpush.msra.mxu0 %v174
    %205 = vmatpush.msra.mxu0 %v172
    %206 = vmatpush.msra.mxu0 %v170
    %207 = vmatpush.msra.mxu0 %v168
    %208 = vmatpush.msra.mxu0 %v166
    %209 = vmatpush.msra.mxu0 %v164
    %210 = vmatpush.msra.mxu0 %v162
    %211 = vmatpush.msra.mxu0 %v160
    %212 = vmatpush.msra.mxu0 %v158
    %213 = vmatpush.msra.mxu0 %v156
    %214 = vmatpush.msra.mxu0 %v154
    %215 = vmatpush.msra.mxu0 %v152
    %216 = vmatpush.msra.mxu0 %v150
    %217 = vmatpush.msra.mxu0 %v148
    %218 = vmatpush.msra.mxu0 %v146
    %219 = vmatmul.f32.gmra.mxu0 %v144
    %v220 = vpop.f32.mrf.mxu0
    %v221 = vadd.f32 %v180, %v220
    %222 = vdwg.mxu0
    %v223 = vmax.f32 %v201, 0.0
    %v224 = vmax.f32 %v221, 0.0
    %v225 = vld [vmem:[#allocation5] sm:$0xff]
    %v226 = vld [vmem:[#allocation5 + $0x8] sm:$0xff]
    %v227 = vld [vmem:[#allocation5 + $0x10] sm:$0xff]
    %v228 = vld [vmem:[#allocation5 + $0x18] sm:$0xff]
    %v229 = vld [vmem:[#allocation5 + $0x20] sm:$0xff]
    %v230 = vld [vmem:[#allocation5 + $0x28] sm:$0xff]
    %v231 = vld [vmem:[#allocation5 + $0x30] sm:$0xff]
    %v232 = vld [vmem:[#allocation5 + $0x38] sm:$0xff]
    %v233 = vld [vmem:[#allocation5 + $0x40] sm:$0xff]
    %v234 = vld [vmem:[#allocation5 + $0x48] sm:$0xff]
    %v235 = vld [vmem:[#allocation5 + $0x50] sm:$0xff]
    %v236 = vld [vmem:[#allocation5 + $0x58] sm:$0xff]
    %v237 = vld [vmem:[#allocation5 + $0x60] sm:$0xff]
    %v238 = vld [vmem:[#allocation5 + $0x68] sm:$0xff]
    %v239 = vld [vmem:[#allocation5 + $0x70] sm:$0xff]
    %v240 = vld [vmem:[#allocation5 + $0x78] sm:$0xff]
    %v241 = vld [vmem:[#allocation5 + $0x80] sm:$0xff]
    %v242 = vld [vmem:[#allocation5 + $0x88] sm:$0xff]
    %v243 = vld [vmem:[#allocation5 + $0x90] sm:$0xff]
    %v244 = vld [vmem:[#allocation5 + $0x98] sm:$0xff]
    %v245 = vld [vmem:[#allocation5 + $0xa0] sm:$0xff]
    %v246 = vld [vmem:[#allocation5 + $0xa8] sm:$0xff]
    %v247 = vld [vmem:[#allocation5 + $0xb0] sm:$0xff]
    %v248 = vld [vmem:[#allocation5 + $0xb8] sm:$0xff]
    %v249 = vld [vmem:[#allocation5 + $0xc0] sm:$0xff]
    %v250 = vld [vmem:[#allocation5 + $0xc8] sm:$0xff]
    %v251 = vld [vmem:[#allocation5 + $0xd0] sm:$0xff]
    %v252 = vld [vmem:[#allocation5 + $0xd8] sm:$0xff]
    %v253 = vld [vmem:[#allocation5 + $0xe0] sm:$0xff]
    %v254 = vld [vmem:[#allocation5 + $0xe8] sm:$0xff]
    %v255 = vld [vmem:[#allocation5 + $0xf0] sm:$0xff]
    %v256 = vld [vmem:[#allocation5 + $0xf8] sm:$0xff]
    %v257 = vld [vmem:[%s10] sm:$0x1]
    %258 = vmatpush.msra.mxu0 %v240
    %259 = vmatpush.msra.mxu0 %v239
    %260 = vmatpush.msra.mxu0 %v238
    %261 = vmatpush.msra.mxu0 %v237
    %262 = vmatpush.msra.mxu0 %v236
    %263 = vmatpush.msra.mxu0 %v235
    %264 = vmatpush.msra.mxu0 %v234
    %265 = vmatpush.msra.mxu0 %v233
    %266 = vmatpush.msra.mxu0 %v232
    %267 = vmatpush.msra.mxu0 %v231
    %268 = vmatpush.msra.mxu0 %v230
    %269 = vmatpush.msra.mxu0 %v229
    %270 = vmatpush.msra.mxu0 %v228
    %271 = vmatpush.msra.mxu0 %v227
    %272 = vmatpush.msra.mxu0 %v226
    %273 = vmatpush.msra.mxu0 %v225
    %274 = vmatmul.f32.gmra.mxu0 %v223
    %v275 = vpop.f32.mrf.mxu0
    %v276 = vadd.f32 %v257, %v275
    %277 = vdwg.mxu0
    %278 = vmatpush.msra.mxu0 %v256
    %279 = vmatpush.msra.mxu0 %v255
    %280 = vmatpush.msra.mxu0 %v254
    %281 = vmatpush.msra.mxu0 %v253
    %282 = vmatpush.msra.mxu0 %v252
    %283 = vmatpush.msra.mxu0 %v251
    %284 = vmatpush.msra.mxu0 %v250
    %285 = vmatpush.msra.mxu0 %v249
    %286 = vmatpush.msra.mxu0 %v248
    %287 = vmatpush.msra.mxu0 %v247
    %288 = vmatpush.msra.mxu0 %v246
    %289 = vmatpush.msra.mxu0 %v245
    %290 = vmatpush.msra.mxu0 %v244
    %291 = vmatpush.msra.mxu0 %v243
    %292 = vmatpush.msra.mxu0 %v242
    %293 = vmatpush.msra.mxu0 %v241
    %294 = vmatmul.f32.gmra.mxu0 %v224
    %v295 = vpop.f32.mrf.mxu0
    %v296 = vadd.f32 %v276, %v295
    %297 = vdwg.mxu0
    %v298 = vmax.f32 %v296, 0.0
    %v299 = vld [vmem:[%s11] sm:$0xff]
    %v300 = vld [vmem:[%s11 + $0x8] sm:$0xff]
    %v301 = vld [vmem:[%s11 + $0x10] sm:$0xff]
    %v302 = vld [vmem:[%s11 + $0x18] sm:$0xff]
    %v303 = vld [vmem:[%s11 + $0x20] sm:$0xff]
    %v304 = vld [vmem:[%s11 + $0x28] sm:$0xff]
    %v305 = vld [vmem:[%s11 + $0x30] sm:$0xff]
    %v306 = vld [vmem:[%s11 + $0x38] sm:$0xff]
    %v307 = vld [vmem:[%s11 + $0x40] sm:$0xff]
    %v308 = vld [vmem:[%s11 + $0x48] sm:$0xff]
    %v309 = vld [vmem:[%s11 + $0x50] sm:$0xff]
    %v310 = vld [vmem:[%s11 + $0x58] sm:$0xff]
    %v311 = vld [vmem:[%s11 + $0x60] sm:$0xff]
    %v312 = vld [vmem:[%s11 + $0x68] sm:$0xff]
    %v313 = vld [vmem:[%s11 + $0x70] sm:$0xff]
    %v314 = vld [vmem:[%s11 + $0x78] sm:$0xff]
    %v315 = vld [vmem:[%s12] sm:$0x1]
    %316 = vmatpush.msra.mxu0 %v314
    %317 = vmatpush.msra.mxu0 %v313
    %318 = vmatpush.msra.mxu0 %v312
    %319 = vmatpush.msra.mxu0 %v311
    %320 = vmatpush.msra.mxu0 %v310
    %321 = vmatpush.msra.mxu0 %v309
    %322 = vmatpush.msra.mxu0 %v308
    %323 = vmatpush.msra.mxu0 %v307
    %324 = vmatpush.msra.mxu0 %v306
    %325 = vmatpush.msra.mxu0 %v305
    %326 = vmatpush.msra.mxu0 %v304
    %327 = vmatpush.msra.mxu0 %v303
    %328 = vmatpush.msra.mxu0 %v302
    %329 = vmatpush.msra.mxu0 %v301
    %330 = vmatpush.msra.mxu0 %v300
    %331 = vmatpush.msra.mxu0 %v299
    %332 = vmatmul.f32.gmra.mxu0 %v298
    %v333 = vpop.f32.mrf.mxu0
    %v334 = vadd.f32 %v315, %v333
    %335 = vdwg.mxu0
    %v336 = vmax.f32 %v334, 0.0
    %v337 = vld [vmem:[%s13] sm:$0xff]
    %v338 = vld [vmem:[%s13 + $0x8] sm:$0xff]
    %v339 = vld [vmem:[%s13 + $0x10] sm:$0xff]
    %v340 = vld [vmem:[%s13 + $0x18] sm:$0xff]
    %v341 = vld [vmem:[%s13 + $0x20] sm:$0xff]
    %v342 = vld [vmem:[%s13 + $0x28] sm:$0xff]
    %v343 = vld [vmem:[%s13 + $0x30] sm:$0xff]
    %v344 = vld [vmem:[%s13 + $0x38] sm:$0xff]
    %v345 = vld [vmem:[%s14] sm:$0x1]
    %v347 = vsel %vm120, %v336, 0
    %349 = vmatpush.msra.mxu0 0.0
    %350 = vmatpush.msra.mxu0 0.0
    %351 = vmatpush.msra.mxu0 0.0
    %352 = vmatpush.msra.mxu0 0.0
    %353 = vmatpush.msra.mxu0 0.0
    %354 = vmatpush.msra.mxu0 0.0
    %355 = vmatpush.msra.mxu0 0.0
    %356 = vmatpush.msra.mxu0 0.0
    %357 = vmatpush.msra.mxu0 %v344
    %358 = vmatpush.msra.mxu0 %v343
    %359 = vmatpush.msra.mxu0 %v342
    %360 = vmatpush.msra.mxu0 %v341
    %361 = vmatpush.msra.mxu0 %v340
    %362 = vmatpush.msra.mxu0 %v339
    %363 = vmatpush.msra.mxu0 %v338
    %364 = vmatpush.msra.mxu0 %v337
    %365 = vmatmul.f32.gmra.mxu0 %v347
    %v366 = vpop.f32.mrf.mxu0
    %v367 = vadd.f32 %v345, %v366
    %368 = vdwg.mxu0
    %v369 = vxor.u32 %v367, 2147483648
    %v370 = vmul.f32 %v369, 1.442695
    %v371 = vpow.pop %v370
    %v372 = vadd.f32 %v371, 1.0
    %v373 = vrcp.pop %v372
    %v374 = vmul.f32 %v372, %v373
    %v375 = vsub.f32 1.0, %v374
    %v376 = vmul.f32 %v373, %v375
    %v377 = vadd.f32 %v373, %v376
    %vm378 = vweird.f32 %v372
    %vm379 = vweird.f32 %v373
    %vm380 = vmor %vm378, %vm379
    %v381 = vsel %vm380, %v373, %v377
    %v382 = vand.u32 2147483647, %v372
    %vm383 = vcmp.eq.f32.partialorder %v382, 8.507059e+37
    %v384 = vand.u32 %v372, 2147483648
    %v385 = vor.u32 1.1754944e-38, %v384
    %v386 = vsel %vm383, %v385, %v381
    %v387 = vmul.f32 1.0, %v386
    %v388 = vmul.f32 %v387, %v387
    %v389 = vmul.f32 %v388, 7.0
    %v390 = vadd.f32 %v389, 1.0
    %v391 = vld [vmem:[%s0] sm:$0xff]
    %v392 = vld [vmem:[%s0 + $0x8] sm:$0xff]
    %v393 = vld [vmem:[%s0 + $0x10] sm:$0xff]
    %v394 = vld [vmem:[%s0 + $0x18] sm:$0xff]
    %v395 = vld [vmem:[%s0 + $0x20] sm:$0xff]
    %v396 = vld [vmem:[%s0 + $0x28] sm:$0xff]
    %v397 = vld [vmem:[%s0 + $0x30] sm:$0xff]
    %v398 = vld [vmem:[%s0 + $0x38] sm:$0xff]
    %v399 = vmul.f32 %v391, %v391
    %v400 = vmul.f32 %v392, %v392
    %v401 = vmul.f32 %v393, %v393
    %v402 = vmul.f32 %v394, %v394
    %v403 = vmul.f32 %v395, %v395
    %v404 = vmul.f32 %v396, %v396
    %v405 = vmul.f32 %v397, %v397
    %v406 = vmul.f32 %v398, %v398
    %vm407 = vcmask 261120
    %v408 = vsel %vm407, %v399, 0.0
    %409 = vadd.xlane.f32.xlu0 %v408
    %v410 = vpop.xlane.xlu0 %409
    %v411 = vsel %vm407, %v400, 0.0
    %412 = vadd.xlane.f32.xlu0 %v411
    %v413 = vpop.xlane.xlu0 %412
    %v414 = vsel %vm407, %v401, 0.0
    %415 = vadd.xlane.f32.xlu0 %v414
    %v416 = vpop.xlane.xlu0 %415
    %v417 = vsel %vm407, %v402, 0.0
    %418 = vadd.xlane.f32.xlu0 %v417
    %v419 = vpop.xlane.xlu0 %418
    %v420 = vsel %vm407, %v403, 0.0
    %421 = vadd.xlane.f32.xlu0 %v420
    %v422 = vpop.xlane.xlu0 %421
    %v423 = vsel %vm407, %v404, 0.0
    %424 = vadd.xlane.f32.xlu0 %v423
    %v425 = vpop.xlane.xlu0 %424
    %v426 = vsel %vm407, %v405, 0.0
    %427 = vadd.xlane.f32.xlu0 %v426
    %v428 = vpop.xlane.xlu0 %427
    %v429 = vsel %vm407, %v406, 0.0
    %430 = vadd.xlane.f32.xlu0 %v429
    %v431 = vpop.xlane.xlu0 %430
    %v432 = vrsqrt.pop %v410
    %v433 = vmul.f32 %v432, %v410
    %v434 = vmul.f32 %v433, %v432
    %v435 = vmul.f32 0.5, %v434
    %v436 = vsub.f32 1.5, %v435
    %v437 = vmul.f32 %v432, %v436
    %vm438 = vweird.f32 %v410
    %vm439 = vweird.f32 %v432
    %vm440 = vmor %vm438, %vm439
    %v441 = vsel %vm440, %v432, %v437
    %v442 = vrsqrt.pop %v413
    %v443 = vmul.f32 %v442, %v413
    %v444 = vmul.f32 %v443, %v442
    %v445 = vmul.f32 0.5, %v444
    %v446 = vsub.f32 1.5, %v445
    %v447 = vmul.f32 %v442, %v446
    %vm448 = vweird.f32 %v413
    %vm449 = vweird.f32 %v442
    %vm450 = vmor %vm448, %vm449
    %v451 = vsel %vm450, %v442, %v447
    %v452 = vrsqrt.pop %v416
    %v453 = vmul.f32 %v452, %v416
    %v454 = vmul.f32 %v453, %v452
    %v455 = vmul.f32 0.5, %v454
    %v456 = vsub.f32 1.5, %v455
    %v457 = vmul.f32 %v452, %v456
    %vm458 = vweird.f32 %v416
    %vm459 = vweird.f32 %v452
    %vm460 = vmor %vm458, %vm459
    %v461 = vsel %vm460, %v452, %v457
    %v462 = vrsqrt.pop %v419
    %v463 = vmul.f32 %v462, %v419
    %v464 = vmul.f32 %v463, %v462
    %v465 = vmul.f32 0.5, %v464
    %v466 = vsub.f32 1.5, %v465
    %v467 = vmul.f32 %v462, %v466
    %vm468 = vweird.f32 %v419
    %vm469 = vweird.f32 %v462
    %vm470 = vmor %vm468, %vm469
    %v471 = vsel %vm470, %v462, %v467
    %v472 = vrsqrt.pop %v422
    %v473 = vmul.f32 %v472, %v422
    %v474 = vmul.f32 %v473, %v472
    %v475 = vmul.f32 0.5, %v474
    %v476 = vsub.f32 1.5, %v475
    %v477 = vmul.f32 %v472, %v476
    %vm478 = vweird.f32 %v422
    %vm479 = vweird.f32 %v472
    %vm480 = vmor %vm478, %vm479
    %v481 = vsel %vm480, %v472, %v477
    %v482 = vrsqrt.pop %v425
    %v483 = vmul.f32 %v482, %v425
    %v484 = vmul.f32 %v483, %v482
    %v485 = vmul.f32 0.5, %v484
    %v486 = vsub.f32 1.5, %v485
    %v487 = vmul.f32 %v482, %v486
    %vm488 = vweird.f32 %v425
    %vm489 = vweird.f32 %v482
    %vm490 = vmor %vm488, %vm489
    %v491 = vsel %vm490, %v482, %v487
    %v492 = vrsqrt.pop %v428
    %v493 = vmul.f32 %v492, %v428
    %v494 = vmul.f32 %v493, %v492
    %v495 = vmul.f32 0.5, %v494
    %v496 = vsub.f32 1.5, %v495
    %v497 = vmul.f32 %v492, %v496
    %vm498 = vweird.f32 %v428
    %vm499 = vweird.f32 %v492
    %vm500 = vmor %vm498, %vm499
    %v501 = vsel %vm500, %v492, %v497
    %v502 = vrsqrt.pop %v431
    %v503 = vmul.f32 %v502, %v431
    %v504 = vmul.f32 %v503, %v502
    %v505 = vmul.f32 0.5, %v504
    %v506 = vsub.f32 1.5, %v505
    %v507 = vmul.f32 %v502, %v506
    %vm508 = vweird.f32 %v431
    %vm509 = vweird.f32 %v502
    %vm510 = vmor %vm508, %vm509
    %v511 = vsel %vm510, %v502, %v507
    %v512 = vmul.f32 %v391, %v441
    %v513 = vmul.f32 %v392, %v451
    %v514 = vmul.f32 %v393, %v461
    %v515 = vmul.f32 %v394, %v471
    %v516 = vmul.f32 %v395, %v481
    %v517 = vmul.f32 %v396, %v491
    %v518 = vmul.f32 %v397, %v501
    %v519 = vmul.f32 %v398, %v511
    %v520 = vld [vmem:[%s1] sm:$0xff]
    %v521 = vmul.f32 %v520, 1000.0
    %v523 = vsel %vm407, %v512, 0
    %v526 = vsel %vm407, %v513, 0
    %v529 = vsel %vm407, %v514, 0
    %v532 = vsel %vm407, %v515, 0
    %v535 = vsel %vm407, %v516, 0
    %v538 = vsel %vm407, %v517, 0
    %v541 = vsel %vm407, %v518, 0
    %v544 = vsel %vm407, %v519, 0
    %v547 = vsel %vm407, %v521, 0
    %549 = vmatpush.xpose.msra.mxu0 0.0
    %550 = vmatpush.xpose.msra.mxu0 0.0
    %551 = vmatpush.xpose.msra.mxu0 0.0
    %552 = vmatpush.xpose.msra.mxu0 0.0
    %553 = vmatpush.xpose.msra.mxu0 0.0
    %554 = vmatpush.xpose.msra.mxu0 0.0
    %555 = vmatpush.xpose.msra.mxu0 0.0
    %556 = vmatpush.xpose.msra.mxu0 0.0
    %557 = vmatpush.xpose.msra.mxu0 0.0
    %558 = vmatpush.xpose.msra.mxu0 0.0
    %559 = vmatpush.xpose.msra.mxu0 0.0
    %560 = vmatpush.xpose.msra.mxu0 0.0
    %561 = vmatpush.xpose.msra.mxu0 0.0
    %562 = vmatpush.xpose.msra.mxu0 0.0
    %563 = vmatpush.xpose.msra.mxu0 0.0
    %564 = vmatpush.xpose.msra.mxu0 %v547
    %565 = vmatmul.f32.gmra.mxu0 %v523
    %v566 = vpop.f32.mrf.mxu0
    %v567 = vadd.f32 0.0, %v566
    %568 = vmatmul.f32.gmra.mxu0 %v526
    %v569 = vpop.f32.mrf.mxu0
    %v570 = vadd.f32 0.0, %v569
    %571 = vmatmul.f32.gmra.mxu0 %v529
    %v572 = vpop.f32.mrf.mxu0
    %v573 = vadd.f32 0.0, %v572
    %574 = vmatmul.f32.gmra.mxu0 %v532
    %v575 = vpop.f32.mrf.mxu0
    %v576 = vadd.f32 0.0, %v575
    %577 = vmatmul.f32.gmra.mxu0 %v535
    %v578 = vpop.f32.mrf.mxu0
    %v579 = vadd.f32 0.0, %v578
    %580 = vmatmul.f32.gmra.mxu0 %v538
    %v581 = vpop.f32.mrf.mxu0
    %v582 = vadd.f32 0.0, %v581
    %583 = vmatmul.f32.gmra.mxu0 %v541
    %v584 = vpop.f32.mrf.mxu0
    %v585 = vadd.f32 0.0, %v584
    %586 = vmatmul.f32.gmra.mxu0 %v544
    %v587 = vpop.f32.mrf.mxu0
    %v588 = vadd.f32 0.0, %v587
    %589 = vdwg.mxu0
    %v590 = vsel %vm86, %v567, -inf
    %591 = vmax.xlane.f32.xlu0 %v590
    %v592 = vpop.xlane.xlu0 %591
    %v593 = vsel %vm86, %v570, -inf
    %594 = vmax.xlane.f32.xlu0 %v593
    %v595 = vpop.xlane.xlu0 %594
    %v596 = vsel %vm86, %v573, -inf
    %597 = vmax.xlane.f32.xlu0 %v596
    %v598 = vpop.xlane.xlu0 %597
    %v599 = vsel %vm86, %v576, -inf
    %600 = vmax.xlane.f32.xlu0 %v599
    %v601 = vpop.xlane.xlu0 %600
    %v602 = vsel %vm86, %v579, -inf
    %603 = vmax.xlane.f32.xlu0 %v602
    %v604 = vpop.xlane.xlu0 %603
    %v605 = vsel %vm86, %v582, -inf
    %606 = vmax.xlane.f32.xlu0 %v605
    %v607 = vpop.xlane.xlu0 %606
    %v608 = vsel %vm86, %v585, -inf
    %609 = vmax.xlane.f32.xlu0 %v608
    %v610 = vpop.xlane.xlu0 %609
    %v611 = vsel %vm86, %v588, -inf
    %612 = vmax.xlane.f32.xlu0 %v611
    %v613 = vpop.xlane.xlu0 %612
    %v614 = vsub.f32 %v567, %v592
    %v615 = vsub.f32 %v570, %v595
    %v616 = vsub.f32 %v573, %v598
    %v617 = vsub.f32 %v576, %v601
    %v618 = vsub.f32 %v579, %v604
    %v619 = vsub.f32 %v582, %v607
    %v620 = vsub.f32 %v585, %v610
    %v621 = vsub.f32 %v588, %v613
    %v622 = vmul.f32 %v614, 1.442695
    %v623 = vpow.pop %v622
    %v624 = vmul.f32 %v615, 1.442695
    %v625 = vpow.pop %v624
    %v626 = vmul.f32 %v616, 1.442695
    %v627 = vpow.pop %v626
    %v628 = vmul.f32 %v617, 1.442695
    %v629 = vpow.pop %v628
    %v630 = vmul.f32 %v618, 1.442695
    %v631 = vpow.pop %v630
    %v632 = vmul.f32 %v619, 1.442695
    %v633 = vpow.pop %v632
    %v634 = vmul.f32 %v620, 1.442695
    %v635 = vpow.pop %v634
    %v636 = vmul.f32 %v621, 1.442695
    %v637 = vpow.pop %v636
    %v638 = vsel %vm86, %v623, 0.0
    %639 = vadd.xlane.f32.xlu0 %v638
    %v640 = vpop.xlane.xlu0 %639
    %v641 = vsel %vm86, %v625, 0.0
    %642 = vadd.xlane.f32.xlu0 %v641
    %v643 = vpop.xlane.xlu0 %642
    %v644 = vsel %vm86, %v627, 0.0
    %645 = vadd.xlane.f32.xlu0 %v644
    %v646 = vpop.xlane.xlu0 %645
    %v647 = vsel %vm86, %v629, 0.0
    %648 = vadd.xlane.f32.xlu0 %v647
    %v649 = vpop.xlane.xlu0 %648
    %v650 = vsel %vm86, %v631, 0.0
    %651 = vadd.xlane.f32.xlu0 %v650
    %v652 = vpop.xlane.xlu0 %651
    %v653 = vsel %vm86, %v633, 0.0
    %654 = vadd.xlane.f32.xlu0 %v653
    %v655 = vpop.xlane.xlu0 %654
    %v656 = vsel %vm86, %v635, 0.0
    %657 = vadd.xlane.f32.xlu0 %v656
    %v658 = vpop.xlane.xlu0 %657
    %v659 = vsel %vm86, %v637, 0.0
    %660 = vadd.xlane.f32.xlu0 %v659
    %v661 = vpop.xlane.xlu0 %660
    %v662 = vrcp.pop %v640
    %v663 = vrcp.pop %v643
    %v664 = vrcp.pop %v646
    %v665 = vrcp.pop %v649
    %v666 = vrcp.pop %v652
    %v667 = vrcp.pop %v655
    %v668 = vrcp.pop %v658
    %v669 = vrcp.pop %v661
    %v670 = vmul.f32 %v623, %v662
    %v671 = vmul.f32 %v625, %v663
    %v672 = vmul.f32 %v627, %v664
    %v673 = vmul.f32 %v629, %v665
    %v674 = vmul.f32 %v631, %v666
    %v675 = vmul.f32 %v633, %v667
    %v676 = vmul.f32 %v635, %v668
    %v677 = vmul.f32 %v637, %v669
    %v678 = vperm.slane %v390, 0
    %v679 = vmul.f32 %v670, %v678
    %v680 = vmul.f32 %v671, %v678
    %v681 = vmul.f32 %v672, %v678
    %v682 = vmul.f32 %v673, %v678
    %v683 = vmul.f32 %v674, %v678
    %v684 = vmul.f32 %v675, %v678
    %v685 = vmul.f32 %v676, %v678
    %v686 = vmul.f32 %v677, %v678
    %v687 = vsel %vm86, %v679, 0.0
    %688 = vadd.xlane.f32.xlu0 %v687
    %v689 = vpop.xlane.xlu0 %688
    %v690 = vsel %vm86, %v680, 0.0
    %691 = vadd.xlane.f32.xlu0 %v690
    %v692 = vpop.xlane.xlu0 %691
    %v693 = vsel %vm86, %v681, 0.0
    %694 = vadd.xlane.f32.xlu0 %v693
    %v695 = vpop.xlane.xlu0 %694
    %v696 = vsel %vm86, %v682, 0.0
    %697 = vadd.xlane.f32.xlu0 %v696
    %v698 = vpop.xlane.xlu0 %697
    %v699 = vsel %vm86, %v683, 0.0
    %700 = vadd.xlane.f32.xlu0 %v699
    %v701 = vpop.xlane.xlu0 %700
    %v702 = vsel %vm86, %v684, 0.0
    %703 = vadd.xlane.f32.xlu0 %v702
    %v704 = vpop.xlane.xlu0 %703
    %v705 = vsel %vm86, %v685, 0.0
    %706 = vadd.xlane.f32.xlu0 %v705
    %v707 = vpop.xlane.xlu0 %706
    %v708 = vsel %vm86, %v686, 0.0
    %709 = vadd.xlane.f32.xlu0 %v708
    %v710 = vpop.xlane.xlu0 %709
    %v719 = vlaneseq
    %v720 = vand.u32 %v719, 127
    %v721 = vperm.slane %v689, %v720
    %v722 = vadd.s32 %v720, 4294967288
    %v723 = vperm.slane %v692, %v722
    %vm724 = vcmask 130112
    %v725 = vsel %vm724, %v723, %v721
    %v726 = vadd.s32 %v720, 4294967280
    %v727 = vperm.slane %v695, %v726
    %vm728 = vcmask 195712
    %v729 = vsel %vm728, %v727, %v725
    %v730 = vadd.s32 %v720, 4294967272
    %v731 = vperm.slane %v698, %v730
    %vm732 = vcmask 261312
    %v733 = vsel %vm732, %v731, %v729
    %v734 = vadd.s32 %v720, 4294967264
    %v735 = vperm.slane %v701, %v734
    %vm736 = vcmask 326912
    %v737 = vsel %vm736, %v735, %v733
    %v738 = vadd.s32 %v720, 4294967256
    %v739 = vperm.slane %v704, %v738
    %vm740 = vcmask 392512
    %v741 = vsel %vm740, %v739, %v737
    %v742 = vadd.s32 %v720, 4294967248
    %v743 = vperm.slane %v707, %v742
    %vm744 = vcmask 458112
    %v745 = vsel %vm744, %v743, %v741
    %v746 = vadd.s32 %v720, 4294967240
    %v747 = vperm.slane %v710, %v746
    %vm748 = vcmask 523712
    %v749 = vsel %vm748, %v747, %v745
    %vm751 = vcmask 516096
    %752 = vst.msk [vmem:[#allocation7] sm:$0x1] %vm751, %v749
    // Predicated region
    $region70: #{tpu_custom_call.1} parent=1 // pred_check
      _
    $region71: #{tpu_custom_call.1} parent=1 // pred_check_branch
      %754 = sbr.rel (0) target = $region73
    $region72: #{tpu_custom_call.1} parent=1 // pred_region
      %756 = vsyncadd [#allocation4], 0
      %s758 = sshll.u32 [#allocation7], 4
      %s759 = int_to_ptr.vmem [resolvable:$true] %s758
      %s760 = sshll.u32 %s15, 4
      %s761 = int_to_ptr.hbm [resolvable:$true] %s760
      %763 = dma.vmem_to_hbm [thread:$0]  %s759, 16, %s761, [#allocation4]
    $region73: #{tpu_custom_call.1} parent=1 // pred_fallthru
      _
    // Predicated region
    $region74: #{tpu_custom_call.1} parent=1 // pred_check
      _
    $region75: #{tpu_custom_call.1} parent=1 // pred_check_branch
      %765 = sbr.rel (0) target = $region77
    $region76: #{tpu_custom_call.1} parent=1 // pred_region
      %767 = dma.done [#allocation4], 16
    $region77: #{tpu_custom_call.1} parent=1 // pred_fallthru
      _
    %768 = vsyncpa [#allocation3], 1
    %769 = vsyncpa [#allocation6], 1
    %770 = vsyncpa [#allocation4], 1

</llo_original>
